<compile_context>
chip_gen: v7x
topology: tpu7x:2x2x1
jax: 0.10.0
libtpu: 0.0.40
codegen_flags: <defaults>
</compile_context>

<pallas_src>
import numpy as np
import jax
import jax.numpy as jnp
from jax.experimental import pallas as pl
from jax.experimental.pallas import tpu as pltpu


# ---------------------------------------------------------------------------
# Kernel 1: keep_cls MLP (Linear -> PReLU -> Linear -> 2-class softmax) on
# edge-difference features, computed transposed so the output is lane-dense.
#   xT    : (D, TE)  bf16 tile of (feat[src] - feat[dst]).T  (edges on lanes)
#   w1t   : (H, D)   bf16 first Linear weight, (out, in) layout
#   b1    : (H, 1)   f32
#   alpha : (H, 1)   f32 per-channel PReLU slope
#   w2col : (H, 1)   f32  w2[:, 1] - w2[:, 0]   (folded second Linear)
#   b2d   : (1, 1)   f32  b2[1] - b2[0]
#   out   : (1, TE)  p1 = softmax(logits)[1] = sigmoid(l1 - l0)
# ---------------------------------------------------------------------------
def _keep_cls_kernel(xT_ref, w1t_ref, b1_ref, alpha_ref, w2col_ref, b2d_ref, o_ref):
    x = xT_ref[...]                                                    # (D, TE) bf16
    h = jnp.dot(w1t_ref[...], x, preferred_element_type=jnp.float32)   # MXU bf16 -> f32
    h = h + b1_ref[...]
    h = jnp.where(h > 0, h, alpha_ref[...] * h)                        # PReLU (VPU)
    # Folded second Linear: degenerate (1,H)x(H,TE) matmul replaced by a VPU
    # multiply + sublane (XLU) reduce -- keeps the MXU path free of M=1 shapes.
    d = jnp.sum(w2col_ref[...] * h, axis=0, keepdims=True) + b2d_ref[...]   # (1, TE)
    # Exact sigmoid: kernel is DMA/per-step-overhead bound, exact divide is free
    # and avoids perturbing the downstream per-row argsort on near-ties.
    o_ref[...] = 1.0 / (1.0 + jnp.exp(-d))


def keep_cls_prob(diff, w1, b1, alpha, w2, b2, *,
                  max_tile_e=8192, vmem_budget_bytes=8 * 1024 * 1024):
    """diff: (E, D) float32 -> (E, 2) softmax probabilities."""
    E, D = diff.shape
    H = w1.shape[1]
    if E == 0:
        return jnp.zeros((0, 2), jnp.float32)

    # Bytes per edge column in the pipeline: bf16 input (double-buffered) +
    # f32 output (double-buffered) + f32 hidden intermediate.
    per_edge = 2 * D * 2 + 2 * 1 * 4 + H * 4
    cap = max(128, vmem_budget_bytes // per_edge)
    tile_e = int(min(max_tile_e, cap))
    tile_e = max(128, (tile_e // 128) * 128)
    # Never allocate a block (much) wider than the edge list itself.
    tile_e = min(tile_e, int(pl.cdiv(E, 128)) * 128)
    # Ensure >= 2 grid steps when there is enough work (v7x has 2 TensorCores;
    # costs nothing on v5e/v6e).
    if E > 256:
        half = int(pl.cdiv(int(pl.cdiv(E, 2)), 128)) * 128
        tile_e = min(tile_e, max(128, half))
    grid_e = int(pl.cdiv(E, tile_e))

    # Edges on the lane axis (lane-dense output); no pad copy -- ragged last block.
    diff_t = jnp.asarray(diff.T, jnp.bfloat16)                   # (D, E)
    w1t = jnp.asarray(w1.T, jnp.bfloat16)                        # (H, D)
    b1c = jnp.asarray(b1, jnp.float32).reshape(H, 1)
    alphac = jnp.asarray(alpha, jnp.float32).reshape(H, 1)
    w2col = jnp.asarray(w2[:, 1] - w2[:, 0], jnp.float32).reshape(H, 1)
    b2d = jnp.asarray(b2[1] - b2[0], jnp.float32).reshape(1, 1)

    p1 = pl.pallas_call(
        _keep_cls_kernel,
        out_shape=jax.ShapeDtypeStruct((1, E), jnp.float32),
        grid=(grid_e,),
        in_specs=[
            pl.BlockSpec((D, tile_e), lambda i: (0, i)),
            pl.BlockSpec((H, D), lambda i: (0, 0)),
            pl.BlockSpec((H, 1), lambda i: (0, 0)),
            pl.BlockSpec((H, 1), lambda i: (0, 0)),
            pl.BlockSpec((H, 1), lambda i: (0, 0)),
            pl.BlockSpec((1, 1), lambda i: (0, 0)),
        ],
        out_specs=pl.BlockSpec((1, tile_e), lambda i: (0, i)),
        compiler_params=pltpu.CompilerParams(dimension_semantics=("parallel",)),
    )(diff_t, w1t, b1c, alphac, w2col, b2d)

    p1 = p1[0]
    # softmax over 2 classes == [1 - sigmoid(l1-l0), sigmoid(l1-l0)]
    return jnp.stack([1.0 - p1, p1], axis=1)


# ---------------------------------------------------------------------------
# Kernel 2: degree normalization  new_adj = adj / (sum(adj, 1)[:, None] + 1e-6)
# ---------------------------------------------------------------------------
def _degnorm_kernel(adj_ref, o_ref):
    a = adj_ref[...]
    deg = jnp.sum(a, axis=1, keepdims=True)
    o_ref[...] = a / (deg + 1e-6)          # exact divide; kernel is HBM-bound


def degree_normalize(adj, *, max_tile_r=1024,
                     vmem_budget_bytes=32 * 1024 * 1024,
                     vmem_limit_bytes=40 * 1024 * 1024):
    N, M = adj.shape
    adj = jnp.asarray(adj, jnp.float32)

    # Double-buffered in + out f32 blocks: 4 * tile_r * M * 4 bytes fit the budget.
    # 32 MiB buffers / 40 MiB scoped limit is safe on every generation
    # (v7x: 64 MiB physical per TC; v5e/v6e: 128 MiB).
    cap = max(8, vmem_budget_bytes // (16 * M))
    tile_r = int(min(max_tile_r, cap, int(pl.cdiv(N, 8)) * 8))
    tile_r = max(8, (tile_r // 8) * 8)
    # Ensure >= 2 grid steps when there is enough work (v7x megacore).
    if N > 256:
        half = int(pl.cdiv(int(pl.cdiv(N, 2)), 8)) * 8
        tile_r = min(tile_r, max(8, half))
    grid_r = int(pl.cdiv(N, tile_r))

    # No wrapper pad copy: ragged last block, Pallas masks the stores.
    return pl.pallas_call(
        _degnorm_kernel,
        out_shape=jax.ShapeDtypeStruct((N, M), jnp.float32),
        grid=(grid_r,),
        in_specs=[pl.BlockSpec((tile_r, M), lambda i: (i, 0))],
        out_specs=pl.BlockSpec((tile_r, M), lambda i: (i, 0)),
        compiler_params=pltpu.CompilerParams(
            dimension_semantics=("parallel",),
            vmem_limit_bytes=vmem_limit_bytes),
    )(adj)


# ---------------------------------------------------------------------------
# Module wrapper (deterministic synthetic parameters, no checkpoint loading).
# ---------------------------------------------------------------------------
class DenoisePoolV1:
    def __init__(self, feat_dim, dropout_rate=0.5, denoise_topK_rate=0.5, key=None):
        self.denoise_topK_rate = denoise_topK_rate
        H = feat_dim // 2
        k1, k2, k3, k4 = jax.random.split(key, 4)
        # keep_cls = Linear(D, D//2) -> PReLU(D//2) -> Linear(D//2, 2)
        self.w1 = (jax.random.normal(k1, (feat_dim, H)) / np.sqrt(feat_dim)).astype(jnp.float32)
        self.b1 = (0.01 * jax.random.normal(k2, (H,))).astype(jnp.float32)
        self.alpha = jnp.full((H,), 0.25, jnp.float32)      # PReLU default init
        self.w2 = (jax.random.normal(k3, (H, 2)) / np.sqrt(H)).astype(jnp.float32)
        self.b2 = (0.01 * jax.random.normal(k4, (2,))).astype(jnp.float32)

    def __call__(self, adj, feat, dst_num):
        adj = jnp.asarray(adj, jnp.float32)
        feat = jnp.asarray(feat, jnp.float32)
        N = adj.shape[0]
        adj_dst = adj[:dst_num]

        # pair_list = adj[:dst_num].nonzero()
        # TODO(synk): nonzero has a data-dependent output shape; stays as eager glue.
        rows, cols = jnp.nonzero(adj_dst)
        pair_list = jnp.stack([rows, cols], axis=1).astype(jnp.int32)
        E = int(pair_list.shape[0])
        before_edge_num = E / dst_num

        # feat[src] - feat[dst] gather (XLA glue), then the MLP hot path in Pallas.
        diff = feat[pair_list[:, 0]] - feat[pair_list[:, 1]]
        prob_arr = keep_cls_prob(diff, self.w1, self.b1, self.alpha, self.w2, self.b2)

        # --- per-dst-row top-K pruning, vectorized on device (no host loop) ---
        # Dense prob map: non-edges get +inf so they sort after all real edges.
        p1 = prob_arr[:, 1]
        dense_prob = jnp.full((dst_num, N), jnp.inf, jnp.float32)
        dense_prob = dense_prob.at[pair_list[:, 0], pair_list[:, 1]].set(p1)
        deg = jnp.count_nonzero(adj_dst, axis=1).astype(jnp.float32)
        # int(len * (1 - rate)); exact for rate=0.5 (float edge-cases for other rates).
        k = jnp.floor(deg * jnp.float32(1.0 - self.denoise_topK_rate)).astype(jnp.int32)
        order = jnp.argsort(dense_prob, axis=1)                 # stable, ascending
        rank = jnp.argsort(order, axis=1)                       # rank[i, j] of column j
        zero_mask = (rank < k[:, None]) & (adj_dst != 0)
        adj_pruned = adj.at[:dst_num].set(jnp.where(zero_mask, 0.0, adj_dst))

        # left_row: per row, kept edges ordered by ascending prob (reference order).
        edge_rank = rank[pair_list[:, 0], pair_list[:, 1]]
        keep_edge = edge_rank >= k[pair_list[:, 0]]
        sort_key = pair_list[:, 0] * jnp.int32(N) + edge_rank.astype(jnp.int32)
        edge_order = jnp.argsort(sort_key)
        # TODO(synk): boolean compaction has a data-dependent shape; eager glue.
        left_row = edge_order[keep_edge[edge_order]]

        after_edge_num = int(jnp.count_nonzero(adj_pruned[:dst_num])) / dst_num

        # Degree normalization of the pruned adjacency (Pallas kernel).
        new_adj = degree_normalize(adj_pruned)
        new_feat = feat
        return (new_adj, new_feat, prob_arr, pair_list,
                before_edge_num, after_edge_num, left_row)


if __name__ == "__main__":
    key = jax.random.PRNGKey(0)
    k_adj, k_feat, k_param = jax.random.split(key, 3)

    N, D, dst_num = 16, 32, 8
    feat = jax.random.normal(k_feat, (N, D), jnp.float32)
    adj = (jax.random.uniform(k_adj, (N, N)) > 0.4).astype(jnp.float32)
    adj = adj.at[jnp.arange(N), jnp.arange(N)].set(1.0)   # self-loops: every row non-empty

    model = DenoisePoolV1(D, key=k_param)
    (new_adj, new_feat, prob_arr, pair_list,
     before_e, after_e, left_row) = model(adj, feat, dst_num)
    jax.block_until_ready((new_adj, new_feat, prob_arr, pair_list, left_row))

    # --- sanity / correctness checks against straightforward references ---
    assert new_adj.shape == (N, N) and prob_arr.shape[1] == 2
    assert bool(jnp.all(jnp.abs(jnp.sum(prob_arr, axis=1) - 1.0) < 1e-5))

    # keep_cls reference (same bf16 first-matmul precision as the kernel)
    diff = feat[pair_list[:, 0]] - feat[pair_list[:, 1]]
    h = jnp.dot(diff.astype(jnp.bfloat16), model.w1.astype(jnp.bfloat16),
                preferred_element_type=jnp.float32) + model.b1
    h = jnp.where(h > 0, h, model.alpha * h)
    logits = h @ model.w2 + model.b2
    prob_ref = jax.nn.softmax(logits, axis=1)
    assert np.allclose(np.asarray(prob_arr), np.asarray(prob_ref), atol=2e-3)

    # pruning + degree-normalization reference (NumPy loop mirroring the PyTorch code)
    prob_np = np.asarray(prob_arr)
    pairs_np = np.asarray(pair_list)
    adj_ref = np.asarray(adj).copy()
    left_ref = []
    for i in range(dst_num):
        gr = np.where(pairs_np[:, 0] == i)[0]
        order_i = np.argsort(prob_np[gr, 1], kind="stable")
        k0 = int(len(gr) * (1 - model.denoise_topK_rate))
        adj_ref[i, pairs_np[gr][order_i[:k0], 1]] = 0
        left_ref.append(gr[order_i[k0:]])
    left_ref = np.concatenate(left_ref) if left_ref else np.zeros((0,), np.int64)
    new_adj_ref = adj_ref / (adj_ref.sum(1)[:, None] + 1e-6)
    assert np.allclose(np.asarray(new_adj), new_adj_ref, rtol=1e-5, atol=1e-5)
    assert np.array_equal(np.asarray(left_row), left_ref)

    print("KERNEL_OK")
</pallas_src>

<mosaic_0001>
module attributes {stable_mosaic.version = 11 : i64} {
  func.func @_keep_cls_kernel(%arg0: i32, %arg1: memref<32x128xbf16, #tpu.memory_space<vmem>>, %arg2: memref<16x32xbf16, #tpu.memory_space<vmem>>, %arg3: memref<16x1xf32, #tpu.memory_space<vmem>>, %arg4: memref<16x1xf32, #tpu.memory_space<vmem>>, %arg5: memref<16x1xf32, #tpu.memory_space<vmem>>, %arg6: memref<1x1xf32, #tpu.memory_space<vmem>>, %arg7: memref<1x128xf32, #tpu.memory_space<vmem>>) attributes {dimension_semantics = [#tpu.dimension_semantics<parallel>], iteration_bounds = array<i64: 1>, scalar_prefetch = 0 : i64, scratch_operands = 0 : i64, tpu.core_type = #tpu.core_type<tc>, window_params = [{transform_indices = @transform_0, window_bounds = array<i64: 32, 128>}, {pipeline_mode = #tpu.pipeline_mode<synchronous>, transform_indices = @transform_1, window_bounds = array<i64: 16, 32>}, {pipeline_mode = #tpu.pipeline_mode<synchronous>, transform_indices = @transform_2, window_bounds = array<i64: 16, 1>}, {pipeline_mode = #tpu.pipeline_mode<synchronous>, transform_indices = @transform_3, window_bounds = array<i64: 16, 1>}, {pipeline_mode = #tpu.pipeline_mode<synchronous>, transform_indices = @transform_4, window_bounds = array<i64: 16, 1>}, {pipeline_mode = #tpu.pipeline_mode<synchronous>, transform_indices = @transform_5, window_bounds = array<i64: 1, 1>}, {transform_indices = @transform_6, window_bounds = array<i64: 1, 128>}]} {
    %c0 = arith.constant 0 : index
    %c0_0 = arith.constant 0 : index
    %0 = vector.load %arg1[%c0, %c0_0] : memref<32x128xbf16, #tpu.memory_space<vmem>>, vector<32x128xbf16>
    %c0_1 = arith.constant 0 : index
    %c0_2 = arith.constant 0 : index
    %1 = vector.load %arg2[%c0_1, %c0_2] : memref<16x32xbf16, #tpu.memory_space<vmem>>, vector<16x32xbf16>
    %cst = arith.constant dense<0.000000e+00> : vector<16x128xf32>
    %2 = tpu.matmul %1, %0, %cst {dimension_numbers = #tpu.dot_dimension_numbers<[1], [0], [0], [1], [0, 0, 1, 1], [], []>} : vector<16x32xbf16>, vector<32x128xbf16>, vector<16x128xf32> -> vector<16x128xf32>
    %c0_3 = arith.constant 0 : index
    %c0_4 = arith.constant 0 : index
    %3 = vector.load %arg3[%c0_3, %c0_4] : memref<16x1xf32, #tpu.memory_space<vmem>>, vector<16x1xf32>
    %4 = vector.broadcast %3 : vector<16x1xf32> to vector<16x128xf32>
    %5 = arith.addf %2, %4 : vector<16x128xf32>
    %cst_5 = arith.constant 0.000000e+00 : f32
    %6 = vector.broadcast %cst_5 : f32 to vector<16x128xf32>
    %7 = arith.cmpf ogt, %5, %6 : vector<16x128xf32>
    %c0_6 = arith.constant 0 : index
    %c0_7 = arith.constant 0 : index
    %8 = vector.load %arg4[%c0_6, %c0_7] : memref<16x1xf32, #tpu.memory_space<vmem>>, vector<16x1xf32>
    %9 = vector.broadcast %8 : vector<16x1xf32> to vector<16x128xf32>
    %10 = arith.mulf %9, %5 : vector<16x128xf32>
    %11 = arith.select %7, %5, %10 : vector<16x128xi1>, vector<16x128xf32>
    %c0_8 = arith.constant 0 : index
    %c0_9 = arith.constant 0 : index
    %12 = vector.load %arg5[%c0_8, %c0_9] : memref<16x1xf32, #tpu.memory_space<vmem>>, vector<16x1xf32>
    %13 = vector.broadcast %12 : vector<16x1xf32> to vector<16x128xf32>
    %14 = arith.mulf %13, %11 : vector<16x128xf32>
    %cst_10 = arith.constant dense<0.000000e+00> : vector<128xf32>
    %15 = vector.multi_reduction <add>, %14, %cst_10 [0] : vector<16x128xf32> to vector<128xf32>
    %16 = vector.shape_cast %15 : vector<128xf32> to vector<1x128xf32>
    %c0_11 = arith.constant 0 : index
    %c0_12 = arith.constant 0 : index
    %17 = vector.load %arg6[%c0_11, %c0_12] : memref<1x1xf32, #tpu.memory_space<vmem>>, vector<1x1xf32>
    %18 = vector.broadcast %17 : vector<1x1xf32> to vector<1x128xf32>
    %19 = arith.addf %16, %18 : vector<1x128xf32>
    %cst_13 = arith.constant 0.000000e+00 : f32
    %20 = vector.broadcast %cst_13 : f32 to vector<1x128xf32>
    %21 = arith.subf %20, %19 : vector<1x128xf32>
    %22 = math.exp %21 : vector<1x128xf32>
    %cst_14 = arith.constant 1.000000e+00 : f32
    %23 = vector.broadcast %cst_14 : f32 to vector<1x128xf32>
    %24 = arith.addf %23, %22 : vector<1x128xf32>
    %cst_15 = arith.constant 1.000000e+00 : f32
    %25 = vector.broadcast %cst_15 : f32 to vector<1x128xf32>
    %26 = arith.divf %25, %24 : vector<1x128xf32>
    %c0_16 = arith.constant 0 : index
    %c0_17 = arith.constant 0 : index
    %27 = vector.load %arg7[%c0_16, %c0_17] : memref<1x128xf32, #tpu.memory_space<vmem>>, vector<1x128xf32>
    tpu.vector_store %arg7[%c0_16, %c0_17], %26 {strides = array<i32>} : memref<1x128xf32, #tpu.memory_space<vmem>>, vector<1x128xf32>,
    return
  }
  func.func @transform_0(%arg0: i32) -> (i32, i32) {
    %c0_i32 = arith.constant 0 : i32
    %c0_i32_0 = arith.constant 0 : i32
    return %c0_i32, %arg0 : i32, i32
  }
  func.func @transform_1(%arg0: i32) -> (i32, i32) {
    %c0_i32 = arith.constant 0 : i32
    %c0_i32_0 = arith.constant 0 : i32
    %c0_i32_1 = arith.constant 0 : i32
    return %c0_i32, %c0_i32_0 : i32, i32
  }
  func.func @transform_2(%arg0: i32) -> (i32, i32) {
    %c0_i32 = arith.constant 0 : i32
    %c0_i32_0 = arith.constant 0 : i32
    %c0_i32_1 = arith.constant 0 : i32
    return %c0_i32, %c0_i32_0 : i32, i32
  }
  func.func @transform_3(%arg0: i32) -> (i32, i32) {
    %c0_i32 = arith.constant 0 : i32
    %c0_i32_0 = arith.constant 0 : i32
    %c0_i32_1 = arith.constant 0 : i32
    return %c0_i32, %c0_i32_0 : i32, i32
  }
  func.func @transform_4(%arg0: i32) -> (i32, i32) {
    %c0_i32 = arith.constant 0 : i32
    %c0_i32_0 = arith.constant 0 : i32
    %c0_i32_1 = arith.constant 0 : i32
    return %c0_i32, %c0_i32_0 : i32, i32
  }
  func.func @transform_5(%arg0: i32) -> (i32, i32) {
    %c0_i32 = arith.constant 0 : i32
    %c0_i32_0 = arith.constant 0 : i32
    %c0_i32_1 = arith.constant 0 : i32
    return %c0_i32, %c0_i32_0 : i32, i32
  }
  func.func @transform_6(%arg0: i32) -> (i32, i32) {
    %c0_i32 = arith.constant 0 : i32
    %c0_i32_0 = arith.constant 0 : i32
    return %c0_i32, %arg0 : i32, i32
  }
}

</mosaic_0001>

<llo_original>
// kernel: tpu_custom_call.1
$region0: #{tpu_custom_call.1}
  #allocation0 [shape = 'u32[]', space=smem, size = 0x4, offset = 0x4, fixed_abs, tag = 'smem constant byte address 0x4 - core index']
  #allocation1 [shape = 'u32[144,128]{1,0:T(1,128)}', space=vmem, size = 0x12000, scoped, tag = 'internal scratch']
  #allocation2 [shape = 'f32[1,1]{1,0:T(1,128)S(1)}', space=vmem, size = 0x200, scoped, tag = 'scoped memory for tpu_custom_call.1']
  %s0 = inlined_call_operand.vmem [shape: bf16[32,80], index: 0, kind: input, shape index: {}]
  %s1 = inlined_call_operand.vmem [shape: bf16[16,32], index: 1, kind: input, shape index: {}]
  %s2 = inlined_call_operand.vmem [shape: f32[16,1], index: 2, kind: input, shape index: {}]
  %s3 = inlined_call_operand.vmem [shape: f32[16,1], index: 3, kind: input, shape index: {}]
  %s4 = inlined_call_operand.vmem [shape: f32[16,1], index: 4, kind: input, shape index: {}]
  %s5 = inlined_call_operand.<no memory space> [shape: f32[1,1], index: 5, kind: input, shape index: {}]
  %s6 = inlined_call_operand.hbm [shape: f32[1,80], index: 6, kind: output, shape index: {}]
  %s7 = sld [smem:[#allocation0]]
  $region34: #{tpu_custom_call.1} parent=0
    _
  %s9 = ssub.s32 1, %s7
  %s10 = scalar_select 0, %s9, %s7
  %v11 = vstv %s5
  %12 = vst [vmem:[#allocation2] sm:$0x1] %v11
  $region1: #{tpu_custom_call.1} parent=0
    #allocation3 [shape = 'u8[512]{0}', space=vmem, size = 0x400, scoped, tag = 'output window, operand 0, single buffered']
    #allocation4 [shape = 's32[1]{0}', space=sflag, size = 0x4, scoped, tag = 'scoped memory for tpu_custom_call.1']
    %13 = vsyncpa [#allocation4], 0
    // Predicated region
    $region2: #{tpu_custom_call.1} parent=1 // pred_check
      _
    $region3: #{tpu_custom_call.1} parent=1 // pred_check_branch
      %15 = sbr.rel (0) target = $region5
    $region4: #{tpu_custom_call.1} parent=1 // pred_region
      _
    $region5: #{tpu_custom_call.1} parent=1 // pred_fallthru
      _
    // Predicated region
    $region6: #{tpu_custom_call.1} parent=1 // pred_check
      _
    $region7: #{tpu_custom_call.1} parent=1 // pred_check_branch
      %17 = sbr.rel (0) target = $region9
    $region8: #{tpu_custom_call.1} parent=1 // pred_region
      _
    $region9: #{tpu_custom_call.1} parent=1 // pred_fallthru
      _
    // Predicated region
    $region10: #{tpu_custom_call.1} parent=1 // pred_check
      _
    $region11: #{tpu_custom_call.1} parent=1 // pred_check_branch
      %19 = sbr.rel (0) target = $region13
    $region12: #{tpu_custom_call.1} parent=1 // pred_region
      _
    $region13: #{tpu_custom_call.1} parent=1 // pred_fallthru
      _
    // Predicated region
    $region14: #{tpu_custom_call.1} parent=1 // pred_check
      _
    $region15: #{tpu_custom_call.1} parent=1 // pred_check_branch
      %21 = sbr.rel (0) target = $region17
    $region16: #{tpu_custom_call.1} parent=1 // pred_region
      _
    $region17: #{tpu_custom_call.1} parent=1 // pred_fallthru
      _
    // Predicated region
    $region18: #{tpu_custom_call.1} parent=1 // pred_check
      _
    $region19: #{tpu_custom_call.1} parent=1 // pred_check_branch
      %23 = sbr.rel (0) target = $region21
    $region20: #{tpu_custom_call.1} parent=1 // pred_region
      _
    $region21: #{tpu_custom_call.1} parent=1 // pred_fallthru
      _
    // Predicated region
    $region22: #{tpu_custom_call.1} parent=1 // pred_check
      _
    $region23: #{tpu_custom_call.1} parent=1 // pred_check_branch
      %25 = sbr.rel (0) target = $region25
    $region24: #{tpu_custom_call.1} parent=1 // pred_region
      _
    $region25: #{tpu_custom_call.1} parent=1 // pred_fallthru
      _
    %v27 = vld [vmem:[%s0] sm:$0xf]
    %v28 = vld [vmem:[%s0 + $0x4] sm:$0xf]
    %v29 = vld [vmem:[%s0 + $0x8] sm:$0xf]
    %v30 = vld [vmem:[%s0 + $0xc] sm:$0xf]
    %v31 = vld [vmem:[%s1] sm:$0xf]
    %v32 = vld [vmem:[%s1 + $0x4] sm:$0xf]
    %v33 = vld [vmem:[%s2] sm:$0xff]
    %v34 = vld [vmem:[%s2 + $0x8] sm:$0xff]
    %36 = vset.pattern.permute.xlu0 0
    %37 = vperm.xlu0 %36, %v33
    %v38 = vpop.permute.xlu0 %37
    %41 = vset.pattern.permute.xlu0 0
    %42 = vperm.xlu0 %41, %v34
    %v43 = vpop.permute.xlu0 %42
    %v47 = vunpack.c.l.b16 %v31
    %v48 = vunpack.c.l.b16 %v32
    %v49 = vpack.c.b16 %v48, %v47
    %v54 = vunpack.c.l.b16 %v27
    %v55 = vunpack.c.l.b16 %v28
    %v56 = vunpack.c.l.b16 %v29
    %v57 = vunpack.c.l.b16 %v30
    %v58 = vpack.c.b16 %v55, %v54
    %v59 = vpack.c.b16 %v57, %v56
    %vm62 = vcmask 261120
    %v64 = vsel %vm62, %v49, 0
    %66 = vmatprep.subr.bf16.mxu0 0
    %67 = vmatpush1.bf16.msra.mxu0 %v58
    %68 = vmatprep.subr.bf16.mxu0 0
    %69 = vmatpush1.bf16.msra.mxu0 %v59
    %70 = vmatprep.subr.bf16.mxu0 0
    %71 = vmatpush1.bf16.msra.mxu0 0
    %72 = vmatprep.subr.bf16.mxu0 0
    %73 = vmatpush1.bf16.msra.mxu0 0
    %74 = vmatprep.subr.bf16.mxu0 0
    %75 = vmatpush1.bf16.msra.mxu0 0
    %76 = vmatprep.subr.bf16.mxu0 0
    %77 = vmatpush1.bf16.msra.mxu0 0
    %78 = vmatprep.subr.bf16.mxu0 0
    %79 = vmatpush1.bf16.msra.mxu0 0
    %80 = vmatprep.subr.bf16.mxu0 0
    %81 = vmatpush1.bf16.msra.mxu0 0
    %82 = vmatprep.subr.bf16.mxu0 0
    %83 = vmatpush1.bf16.msra.mxu0 0
    %84 = vmatprep.subr.bf16.mxu0 0
    %85 = vmatpush1.bf16.msra.mxu0 0
    %86 = vmatprep.subr.bf16.mxu0 0
    %87 = vmatpush1.bf16.msra.mxu0 0
    %88 = vmatprep.subr.bf16.mxu0 0
    %89 = vmatpush1.bf16.msra.mxu0 0
    %90 = vmatprep.subr.bf16.mxu0 0
    %91 = vmatpush1.bf16.msra.mxu0 0
    %92 = vmatprep.subr.bf16.mxu0 0
    %93 = vmatpush1.bf16.msra.mxu0 0
    %94 = vmatprep.subr.bf16.mxu0 0
    %95 = vmatpush1.bf16.msra.mxu0 0
    %96 = vmatprep.subr.bf16.mxu0 0
    %97 = vmatpush1.bf16.msra.mxu0 0
    %98 = vmatprep.mubr.bf16.mxu0 0
    %99 = vmatmul.mubr.bf16.gmra.mrb[0].mxu0 %v64
    %v100 = vpop.f32.mrb[0].mxu0
    %v101 = vadd.f32 %v38, %v100
    %v102 = vpop.f32.mrb[0].mxu0
    %v103 = vpop.f32.mrb[0].mxu0
    %v104 = vadd.f32 %v43, %v103
    %v105 = vpop.f32.mrb[0].mxu0
    %106 = vdwg.mxu0
    %vm107 = vcmp.gt.f32.partialorder %v101, 0.0
    %vm108 = vcmp.gt.f32.partialorder %v104, 0.0
    %v109 = vld [vmem:[%s3] sm:$0xff]
    %v110 = vld [vmem:[%s3 + $0x8] sm:$0xff]
    %112 = vset.pattern.permute.xlu0 0
    %113 = vperm.xlu0 %112, %v109
    %v114 = vpop.permute.xlu0 %113
    %117 = vset.pattern.permute.xlu0 0
    %118 = vperm.xlu0 %117, %v110
    %v119 = vpop.permute.xlu0 %118
    %v121 = vmul.f32 %v114, %v101
    %v122 = vmul.f32 %v119, %v104
    %v123 = vsel %vm107, %v101, %v121
    %v124 = vsel %vm108, %v104, %v122
    %v125 = vld [vmem:[%s4] sm:$0xff]
    %v126 = vld [vmem:[%s4 + $0x8] sm:$0xff]
    %128 = vset.pattern.permute.xlu0 0
    %129 = vperm.xlu0 %128, %v125
    %v130 = vpop.permute.xlu0 %129
    %133 = vset.pattern.permute.xlu0 0
    %134 = vperm.xlu0 %133, %v126
    %v135 = vpop.permute.xlu0 %134
    %v137 = vmul.f32 %v130, %v123
    %v138 = vmul.f32 %v135, %v124
    %v139 = vadd.f32 %v137, %v138
    %v140 = vrot.slane %v139, 4
    %v141 = vadd.f32 %v139, %v140
    %v142 = vrot.slane %v141, 2
    %v143 = vadd.f32 %v141, %v142
    %v144 = vrot.slane %v143, 1
    %v145 = vadd.f32 %v143, %v144
    %v146 = vld [vmem:[#allocation2] sm:$0x1]
    %148 = vset.pattern.permute.xlu0 0
    %149 = vperm.xlu0 %148, %v146
    %v150 = vpop.permute.xlu0 %149
    %v152 = vlaneseq
    %v153 = vshrl.u32 %v152, 7
    %v154 = vsub.s32 0, %v153
    %v155 = vrot.slane %v150, %v154
    %v156 = vadd.f32 %v145, %v155
    %v157 = vsub.f32 0.0, %v156
    %v158 = vmul.f32 %v157, 1.442695
    %v159 = vpow.pop %v158
    %v160 = vadd.f32 %v159, 1.0
    %v161 = vrcp.pop %v160
    %v162 = vmul.f32 1.0, %v161
    %163 = vst [vmem:[#allocation3] sm:$0x1] %v162
    // Predicated region
    $region26: #{tpu_custom_call.1} parent=1 // pred_check
      _
    $region27: #{tpu_custom_call.1} parent=1 // pred_check_branch
      %165 = sbr.rel (0) target = $region29
    $region28: #{tpu_custom_call.1} parent=1 // pred_region
      %s167 = ssub.s32 16, 16
      %168 = vsyncadd [#allocation4], %s167
      %s170 = sshll.u32 [#allocation3], 4
      %s171 = int_to_ptr.vmem [resolvable:$true] %s170
      %173 = dma.vmem_to_hbm [thread:$0]  %s171, 16, %s6, [#allocation4]
    $region29: #{tpu_custom_call.1} parent=1 // pred_fallthru
      _
    // Predicated region
    $region30: #{tpu_custom_call.1} parent=1 // pred_check
      _
    $region31: #{tpu_custom_call.1} parent=1 // pred_check_branch
      %175 = sbr.rel (0) target = $region33
    $region32: #{tpu_custom_call.1} parent=1 // pred_region
      %176 = dma.done [#allocation4], 16
    $region33: #{tpu_custom_call.1} parent=1 // pred_fallthru
      _
    %177 = vsyncpa [#allocation4], 1

</llo_original>
